<compile_context>
chip_gen: v7x
topology: tpu7x:2x2x1
jax: 0.10.0
libtpu: 0.0.40
codegen_flags: <defaults>
</compile_context>

<pallas_src>
import functools

import jax
import jax.numpy as jnp
import numpy as np
from jax.experimental import pallas as pl
from jax.experimental.pallas import tpu as pltpu


# ---------------------------------------------------------------------------
# Kernel 1: tiled global-average-pool over the spatial axis.
# x block: (1, C, tS) channels-on-sublanes / spatial-on-lanes; reduce lanes.
# ---------------------------------------------------------------------------
def _gap_kernel(x_ref, gap_ref, *, inv_s):
    s = pl.program_id(1)

    @pl.when(s == 0)
    def _():
        gap_ref[...] = jnp.zeros_like(gap_ref)

    # Partial per-channel sum of this spatial tile: (1, C, tS) -> (1, C, 1).
    gap_ref[...] += jnp.sum(x_ref[...], axis=-1, keepdims=True)

    @pl.when(s == pl.num_programs(1) - 1)
    def _():
        gap_ref[...] = gap_ref[...] * inv_s


# ---------------------------------------------------------------------------
# Kernel 2: finalize MLP, batched over all B rows in a single call (M = B).
#   z      = relu([gap, tab] @ Wb + bb)        (concat split into two dots)
#   scale  = z @ Ws + bs ;  shift = z @ Wh + bh
#   pooled = mean(scale*x + shift, spatial) == scale * gap + shift
#   logits = pooled @ Wfc + bfc
# ---------------------------------------------------------------------------
def _daft_mlp_kernel(gap_ref, tab_ref, wb_img_ref, wb_tab_ref, bb_ref,
                     ws_ref, bs_ref, wh_ref, bh_ref, wfc_ref, bfc_ref,
                     out_ref):
    gap = gap_ref[...]                                      # (B, C)
    tab = tab_ref[...]                                      # (B, T)

    z = (jnp.dot(gap, wb_img_ref[...], preferred_element_type=jnp.float32)
         + jnp.dot(tab, wb_tab_ref[...], preferred_element_type=jnp.float32)
         + bb_ref[...])                                     # (B, BN)
    z = jnp.maximum(z, 0.0)                                 # bottleneck ReLU

    scale = jnp.dot(z, ws_ref[...], preferred_element_type=jnp.float32) + bs_ref[...]  # (B, C)
    shift = jnp.dot(z, wh_ref[...], preferred_element_type=jnp.float32) + bh_ref[...]  # (B, C)

    # TODO(synk): resnet.layer4 (external module) treated as identity; under
    # that assumption mean(scale*x + shift) collapses to scale*gap + shift.
    pooled = scale * gap + shift                            # (B, C)
    out_ref[...] = (jnp.dot(pooled, wfc_ref[...], preferred_element_type=jnp.float32)
                    + bfc_ref[...])                         # (B, NC)


def _pick_spatial_tile(S, max_tile):
    """Largest spatial tile: whole S if small, else a 128-multiple dividing S."""
    if S <= max_tile:
        return S
    t = (max_tile // 128) * 128
    while t >= 128:
        if S % t == 0:
            return t
        t -= 128
    return S  # fallback: single full-extent block


def daft_resnet_forward(image_feats, x_tab, params, *, max_spatial_tile=2048):
    """image_feats: [B, C, D, H, W] float32 (post-layer3), x_tab: [B, T] float32."""
    wb_img, wb_tab, bb, ws, bs, wh, bh, wfc, bfc = params
    B, C, D, H, W = image_feats.shape
    NC = wfc.shape[1]
    S = D * H * W

    # Native layout: reshape only (no transpose / no extra HBM copy).
    x3 = image_feats.reshape(B, C, S).astype(jnp.float32)

    tS = _pick_spatial_tile(S, max_spatial_tile)
    nS = S // tS

    # ---- streaming GAP reduction (HBM-roofline part) ----
    gap3 = pl.pallas_call(
        functools.partial(_gap_kernel, inv_s=1.0 / S),
        out_shape=jax.ShapeDtypeStruct((B, C, 1), jnp.float32),
        grid=(B, nS),
        in_specs=[pl.BlockSpec((1, C, tS), lambda b, s: (b, 0, s))],
        out_specs=pl.BlockSpec((1, C, 1), lambda b, s: (b, 0, 0)),
        compiler_params=pltpu.CompilerParams(
            dimension_semantics=("parallel", "arbitrary")),
    )(x3)
    gap2d = gap3.reshape(B, C)

    # ---- tiny finalize MLP: one call, all batch rows at once ----
    logits = pl.pallas_call(
        _daft_mlp_kernel,
        out_shape=jax.ShapeDtypeStruct((B, NC), jnp.float32),
    )(gap2d, x_tab.astype(jnp.float32),
      wb_img, wb_tab, bb, ws, bs, wh, bh, wfc, bfc)
    return logits


def _reference(image_feats, x_tab, params):
    """Un-collapsed reference: full DAFT affine on the feature map, then pool."""
    wb_img, wb_tab, bb, ws, bs, wh, bh, wfc, bfc = params
    gap = jnp.mean(image_feats, axis=(2, 3, 4))                       # [B, C]
    combined = jnp.concatenate([gap, x_tab], axis=1)                  # [B, C+T]
    wb = jnp.concatenate([wb_img, wb_tab], axis=0)                    # [C+T, BN]
    z = jax.nn.relu(combined @ wb + bb)                               # [B, BN]
    scale = z @ ws + bs                                               # [B, C]
    shift = z @ wh + bh
    transformed = (scale[:, :, None, None, None] * image_feats
                   + shift[:, :, None, None, None])
    pooled = jnp.mean(transformed, axis=(2, 3, 4))                    # [B, C]
    return pooled @ wfc + bfc


if __name__ == "__main__":
    # Shapes consistent with DAFTResNet: in_channels hard-coded to 256,
    # 5-D (3-D conv) feature maps, small spatial extents for the test.
    B, C, D, H, W = 2, 256, 4, 8, 8          # S = 256 spatial positions
    T = 8                                    # tabular_dim
    NUM_CLASSES = 1
    BOTTLENECK_FACTOR = 5
    BN = (C + T) // BOTTLENECK_FACTOR        # 52

    key = jax.random.PRNGKey(0)
    ks = jax.random.split(key, 11)

    image_feats = jax.random.normal(ks[0], (B, C, D, H, W), dtype=jnp.float32)
    x_tab = jax.random.normal(ks[1], (B, T), dtype=jnp.float32)

    scale_init = 0.05
    params = (
        scale_init * jax.random.normal(ks[2], (C, BN), dtype=jnp.float32),   # wb_img
        scale_init * jax.random.normal(ks[3], (T, BN), dtype=jnp.float32),   # wb_tab
        scale_init * jax.random.normal(ks[4], (1, BN), dtype=jnp.float32),   # bb
        scale_init * jax.random.normal(ks[5], (BN, C), dtype=jnp.float32),   # ws
        scale_init * jax.random.normal(ks[6], (1, C), dtype=jnp.float32),    # bs
        scale_init * jax.random.normal(ks[7], (BN, C), dtype=jnp.float32),   # wh
        scale_init * jax.random.normal(ks[8], (1, C), dtype=jnp.float32),    # bh
        scale_init * jax.random.normal(ks[9], (C, NUM_CLASSES), dtype=jnp.float32),  # wfc
        scale_init * jax.random.normal(ks[10], (1, NUM_CLASSES), dtype=jnp.float32), # bfc
    )

    # max_spatial_tile=128 forces a multi-step (nS=2) reduction so the
    # init/accumulate/finalize accumulator path is exercised in the test.
    out = daft_resnet_forward(image_feats, x_tab, params, max_spatial_tile=128)
    out = jax.block_until_ready(out)

    ref = jax.block_until_ready(_reference(image_feats, x_tab, params))
    np.testing.assert_allclose(np.asarray(out), np.asarray(ref), rtol=1e-4, atol=1e-4)

    print("KERNEL_OK")
</pallas_src>

<mosaic_0001>
module attributes {stable_mosaic.version = 11 : i64} {
  func.func @_gap_kernel(%arg0: i32, %arg1: i32, %arg2: memref<1x256x128xf32, #tpu.memory_space<vmem>>, %arg3: memref<1x256x1xf32, #tpu.memory_space<vmem>>) attributes {dimension_semantics = [#tpu.dimension_semantics<parallel>, #tpu.dimension_semantics<arbitrary>], iteration_bounds = array<i64: 2, 2>, scalar_prefetch = 0 : i64, scratch_operands = 0 : i64, tpu.core_type = #tpu.core_type<tc>, window_params = [{transform_indices = @transform_0, window_bounds = array<i64: 1, 256, 128>}, {transform_indices = @transform_1, window_bounds = array<i64: 1, 256, 1>}]} {
    %c0_i32 = arith.constant 0 : i32
    %0 = arith.cmpi eq, %arg1, %c0_i32 : i32
    %1 = arith.extui %0 : i1 to i32
    %c0_i32_0 = arith.constant 0 : i32
    %2 = arith.cmpi ne, %1, %c0_i32_0 : i32
    scf.if %2 {
      %cst_10 = arith.constant 0.000000e+00 : f32
      %12 = vector.broadcast %cst_10 : f32 to vector<1x256x1xf32>
      %c0_11 = arith.constant 0 : index
      %c0_12 = arith.constant 0 : index
      %c0_13 = arith.constant 0 : index
      %13 = vector.load %arg3[%c0_11, %c0_12, %c0_13] : memref<1x256x1xf32, #tpu.memory_space<vmem>>, vector<1x256x1xf32>
      tpu.vector_store %arg3[%c0_11, %c0_12, %c0_13], %12 {strides = array<i32>} : memref<1x256x1xf32, #tpu.memory_space<vmem>>, vector<1x256x1xf32>,
    } else {
    }
    %c0 = arith.constant 0 : index
    %c0_1 = arith.constant 0 : index
    %c0_2 = arith.constant 0 : index
    %3 = vector.load %arg3[%c0, %c0_1, %c0_2] : memref<1x256x1xf32, #tpu.memory_space<vmem>>, vector<1x256x1xf32>
    %c0_3 = arith.constant 0 : index
    %c0_4 = arith.constant 0 : index
    %c0_5 = arith.constant 0 : index
    %4 = vector.load %arg2[%c0_3, %c0_4, %c0_5] : memref<1x256x128xf32, #tpu.memory_space<vmem>>, vector<1x256x128xf32>
    %cst = arith.constant dense<0.000000e+00> : vector<1x256xf32>
    %5 = vector.multi_reduction <add>, %4, %cst [2] : vector<1x256x128xf32> to vector<1x256xf32>
    %6 = vector.shape_cast %5 : vector<1x256xf32> to vector<1x256x1xf32>
    %7 = arith.addf %3, %6 : vector<1x256x1xf32>
    %c0_6 = arith.constant 0 : index
    %c0_7 = arith.constant 0 : index
    %c0_8 = arith.constant 0 : index
    %8 = vector.load %arg3[%c0_6, %c0_7, %c0_8] : memref<1x256x1xf32, #tpu.memory_space<vmem>>, vector<1x256x1xf32>
    tpu.vector_store %arg3[%c0_6, %c0_7, %c0_8], %7 {strides = array<i32>} : memref<1x256x1xf32, #tpu.memory_space<vmem>>, vector<1x256x1xf32>,
    %c1_i32 = arith.constant 1 : i32
    %9 = arith.cmpi eq, %arg1, %c1_i32 : i32
    %10 = arith.extui %9 : i1 to i32
    %c0_i32_9 = arith.constant 0 : i32
    %11 = arith.cmpi ne, %10, %c0_i32_9 : i32
    scf.if %11 {
      %c0_10 = arith.constant 0 : index
      %c0_11 = arith.constant 0 : index
      %c0_12 = arith.constant 0 : index
      %12 = vector.load %arg3[%c0_10, %c0_11, %c0_12] : memref<1x256x1xf32, #tpu.memory_space<vmem>>, vector<1x256x1xf32>
      %cst_13 = arith.constant 3.906250e-03 : f32
      %13 = vector.broadcast %cst_13 : f32 to vector<1x256x1xf32>
      %14 = arith.mulf %12, %13 : vector<1x256x1xf32>
      %c0_14 = arith.constant 0 : index
      %c0_15 = arith.constant 0 : index
      %c0_16 = arith.constant 0 : index
      %15 = vector.load %arg3[%c0_14, %c0_15, %c0_16] : memref<1x256x1xf32, #tpu.memory_space<vmem>>, vector<1x256x1xf32>
      tpu.vector_store %arg3[%c0_14, %c0_15, %c0_16], %14 {strides = array<i32>} : memref<1x256x1xf32, #tpu.memory_space<vmem>>, vector<1x256x1xf32>,
    } else {
    }
    return
  }
  func.func @transform_0(%arg0: i32, %arg1: i32) -> (i32, i32, i32) {
    %c0_i32 = arith.constant 0 : i32
    %c0_i32_0 = arith.constant 0 : i32
    return %arg0, %c0_i32, %arg1 : i32, i32, i32
  }
  func.func @transform_1(%arg0: i32, %arg1: i32) -> (i32, i32, i32) {
    %c0_i32 = arith.constant 0 : i32
    %c0_i32_0 = arith.constant 0 : i32
    %c0_i32_1 = arith.constant 0 : i32
    return %arg0, %c0_i32, %c0_i32_0 : i32, i32, i32
  }
}

</mosaic_0001>

<llo_original>
// kernel: tpu_custom_call.1
$region0: #{tpu_custom_call.1}
  #allocation0 [shape = 'u32[]', space=smem, size = 0x4, offset = 0x4, fixed_abs, tag = 'smem constant byte address 0x4 - core index']
  #allocation1 [shape = 'u32[144,128]{1,0:T(1,128)}', space=vmem, size = 0x12000, scoped, tag = 'internal scratch']
  %s0 = inlined_call_operand.hbm [shape: f32[2,256,256], index: 0, kind: input, shape index: {}]
  %s1 = inlined_call_operand.vmem [shape: f32[2,256,1], index: 1, kind: output, shape index: {}]
  %s2 = sld [smem:[#allocation0]]
  $region49: #{tpu_custom_call.1} parent=0
    _
  %s4 = ssub.s32 1, %s2
  %s5 = scalar_select 0, %s4, %s2
  $region1: #{tpu_custom_call.1} parent=0
    #allocation2 [shape = 'u8[262144]{0}', space=vmem, size = 0x40000, scoped, tag = 'input window, operand 0']
    #allocation3 [shape = 's32[2]{0}', space=sflag, size = 0x8, scoped, tag = 'scoped memory for tpu_custom_call.1']
    %6 = vsyncpa [#allocation3], 0
    %s7 = scalar_lea.sflag [#allocation3], 1
    %8 = vsyncpa %s7, 0
    loop: start=0, step=1, limit=6
    $region2: #{tpu_custom_call.1} parent=1 // loop_pre_header
      _
    $region3: #{tpu_custom_call.1} parent=1 // loop_header
      %s10 = sphi 0, %s14
      %p11 = scmp.ge.s32.totalorder %s10, 6
      %s17 = sphi 0, %s29
      %s18 = sphi 0, %s25
      %s19 = sphi 0, %s17
      %s20 = sphi 0, %s18
      %s21 = sphi 0, %s19
      %s22 = sphi 0, %s20
      %s34 = sphi 0, %s36
      %s37 = sphi 0, %s34
      %s38 = sphi 0, %s37
      %s54 = sphi 0, %s38
      %s60 = sphi 0, %s62
      %s63 = sphi 0, %s60
      %s64 = sphi 0, %s63
      %s80 = sphi 0, %s64
    $region4: #{tpu_custom_call.1} parent=1 // loop_header_branch
      %13 = sbr.rel (%p11) target = $region8
    $region5: #{tpu_custom_call.1} parent=1 // loop_body
      %s15 = ssub.s32 %s10, 1
      %s16 = ssub.s32 %s10, 2
      %s23 = sadd.s32 1, %s18
      %p24 = scmp.ge.s32.totalorder %s23, 2
      %s25 = scalar_select %p24, 0, %s23
      %s26 = sadd.s32 1, %s17
      %s27 = scalar_select %p24, %s26, %s17
      %p28 = scmp.ge.s32.totalorder %s27, 2
      %s29 = scalar_select %p28, 0, %s27
      %s30 = ssub.s32 %s17, %s29
      %s31 = ssub.s32 %s18, %s25
      %s32 = sor.u32 %s30, %s31
      %p33 = scmp.eq.s32.totalorder %s32, 0
      %s35 = sadd.s32 %s34, 1
      %s36 = scalar_select %p33, %s34, %s35
      %p39 = pneg %p33
      %p40 = scmp.eq.s32.totalorder %s10, 3
      %p41 = por %p39, %p40
      %p42 = scmp.ne.s32.totalorder %s34, %s37
      %p43 = scmp.eq.s32.totalorder %s10, 0
      %p44 = por %p42, %p43
      %p45 = scmp.ne.s32.totalorder %s34, %s37
      %p46 = scmp.eq.s32.totalorder %s15, 3
      %p47 = por %p45, %p46
      %p48 = scmp.ne.s32.totalorder %s37, %s38
      %p49 = scmp.eq.s32.totalorder %s15, 0
      %p50 = por %p48, %p49
      %p51 = scmp.ne.s32.totalorder %s37, %s38
      %p52 = scmp.eq.s32.totalorder %s16, 3
      %p53 = por %p51, %p52
      %p55 = scmp.ne.s32.totalorder %s38, %s54
      %p56 = scmp.eq.s32.totalorder %s16, 0
      %p57 = por %p55, %p56
      %s58 = ssub.s32 %s17, %s29
      %p59 = scmp.eq.s32.totalorder %s58, 0
      %s61 = sadd.s32 %s60, 1
      %s62 = scalar_select %p59, %s60, %s61
      %p65 = pneg %p59
      %p66 = scmp.eq.s32.totalorder %s10, 3
      %p67 = por %p65, %p66
      %p68 = scmp.ne.s32.totalorder %s60, %s63
      %p69 = scmp.eq.s32.totalorder %s10, 0
      %p70 = por %p68, %p69
      %p71 = scmp.ne.s32.totalorder %s60, %s63
      %p72 = scmp.eq.s32.totalorder %s15, 3
      %p73 = por %p71, %p72
      %p74 = scmp.ne.s32.totalorder %s63, %s64
      %p75 = scmp.eq.s32.totalorder %s15, 0
      %p76 = por %p74, %p75
      %p77 = scmp.ne.s32.totalorder %s63, %s64
      %p78 = scmp.eq.s32.totalorder %s16, 3
      %p79 = por %p77, %p78
      %p81 = scmp.ne.s32.totalorder %s64, %s80
      %p82 = scmp.eq.s32.totalorder %s16, 0
      %p83 = por %p81, %p82
      %p84 = scmp.le.s32.totalorder 1, %s10
      %p85 = scmp.lt.s32.totalorder %s10, 5
      %p86 = pnand %p84, %p85
      %p87 = pneg %p86
      // Predicated region
      $region9: #{tpu_custom_call.1} parent=5 // pred_check
        _
      $region10: #{tpu_custom_call.1} parent=5 // pred_check_branch
        %89 = sbr.rel (%p86) target = $region12
      $region11: #{tpu_custom_call.1} parent=5 // pred_region
        %s90 = ssub.s32 %s10, 1
      $region12: #{tpu_custom_call.1} parent=5 // pred_fallthru
        _
      %p91 = scmp.lt.s32.totalorder %s10, 4
      // Predicated region
      $region13: #{tpu_custom_call.1} parent=5 // pred_check
        %p92 = pneg %p91
      $region14: #{tpu_custom_call.1} parent=5 // pred_check_branch
        %94 = sbr.rel (%p92) target = $region16
      $region15: #{tpu_custom_call.1} parent=5 // pred_region
        // Predicated region
        $region17: #{tpu_custom_call.1} parent=15 // pred_check
          %p95 = pneg %p44
        $region18: #{tpu_custom_call.1} parent=15 // pred_check_branch
          %97 = sbr.rel (%p95) target = $region20
        $region19: #{tpu_custom_call.1} parent=15 // pred_region
          %s98 = sand.u32 %s34, 1
          %s99 = scalar_lea.sflag [#allocation3], %s98
          %s100 = sand.u32 %s34, 1
          %s101 = smul.addr %s100, 256
          %s102 = scalar_lea.vmem [#allocation2], %s101
          %s104 = ssub.s32 4096, 4096
          %105 = vsyncadd %s99, %s104
          %s106 = smul.addr %s17, 64
          %s107 = sadd.s32 %s18, %s106
          %s108 = smul.addr %s107, 128
          %s109 = scalar_lea.hbm %s0, %s108
          %s110 = sshll.u32 %s102, 4
          %s111 = int_to_ptr.vmem [resolvable:$true] %s110
          %116 = dma.hbm_to_vmem [thread:$0]  %s109, 4096, %s111, %s99, 256, 128, 8
        $region20: #{tpu_custom_call.1} parent=15 // pred_fallthru
          _
      $region16: #{tpu_custom_call.1} parent=5 // pred_fallthru
        _
      %p117 = scmp.le.s32.totalorder 1, %s10
      %p118 = scmp.lt.s32.totalorder %s10, 5
      %p119 = pnand %p117, %p118
      %p120 = pneg %p119
      // Predicated region
      $region21: #{tpu_custom_call.1} parent=5 // pred_check
        _
      $region22: #{tpu_custom_call.1} parent=5 // pred_check_branch
        %122 = sbr.rel (%p119) target = $region24
      $region23: #{tpu_custom_call.1} parent=5 // pred_region
        %s123 = ssub.s32 %s10, 1
        %s124 = sand.u32 %s37, 1
        %s125 = scalar_lea.sflag [#allocation3], %s124
        %s126 = sand.u32 %s37, 1
        %s127 = smul.addr %s126, 256
        %s128 = scalar_lea.vmem [#allocation2], %s127
        // Predicated region
        $region25: #{tpu_custom_call.1} parent=23 // pred_check
          %p129 = pneg %p50
        $region26: #{tpu_custom_call.1} parent=23 // pred_check_branch
          %131 = sbr.rel (%p129) target = $region28
        $region27: #{tpu_custom_call.1} parent=23 // pred_region
          %132 = dma.done %s125, 4096
        $region28: #{tpu_custom_call.1} parent=23 // pred_fallthru
          _
        %s133 = sand.u32 %s37, 1
        %s134 = scalar_lea.sflag [#allocation3], %s133
        %s135 = sand.u32 %s37, 1
        %s136 = smul.addr %s135, 256
        %s137 = scalar_lea.vmem [#allocation2], %s136
        %p138 = pneg %p50
        %p139 = pneg %p47
        %p140 = pneg %p76
        %p141 = pneg %p73
        %p142 = scmp.lt.s32.totalorder %s19, 1
        %s143 = scalar_select %p142, %s19, 1
        %s144 = smul.addr %s143, 32
        %s145 = smul.addr %s144, 8
        %s146 = scalar_lea.vmem %s1, %s145
        %p147 = scmp.lt.s32.totalorder %s19, 1
        %s148 = scalar_select %p147, %s19, 1
        %s149 = smul.addr %s148, 32
        %s150 = smul.addr %s149, 8
        %s151 = scalar_lea.vmem %s1, %s150
        %p152 = scmp.eq.s32.totalorder %s20, 0
        // Predicated region
        $region29: #{tpu_custom_call.1} parent=23 // pred_check
          %p153 = pneg %p152
        $region30: #{tpu_custom_call.1} parent=23 // pred_check_branch
          %155 = sbr.rel (%p153) target = $region32
        $region31: #{tpu_custom_call.1} parent=23 // pred_region
          %vm156 = vcmask 7168
          %157 = vst.msk [vmem:[%s151] sm:$0xff] %vm156, 0.0
          %158 = vst.msk [vmem:[%s151 + $0x8] sm:$0xff] %vm156, 0.0
          %159 = vst.msk [vmem:[%s151 + $0x10] sm:$0xff] %vm156, 0.0
          %160 = vst.msk [vmem:[%s151 + $0x18] sm:$0xff] %vm156, 0.0
          %161 = vst.msk [vmem:[%s151 + $0x20] sm:$0xff] %vm156, 0.0
          %162 = vst.msk [vmem:[%s151 + $0x28] sm:$0xff] %vm156, 0.0
          %163 = vst.msk [vmem:[%s151 + $0x30] sm:$0xff] %vm156, 0.0
          %164 = vst.msk [vmem:[%s151 + $0x38] sm:$0xff] %vm156, 0.0
          %165 = vst.msk [vmem:[%s151 + $0x40] sm:$0xff] %vm156, 0.0
          %166 = vst.msk [vmem:[%s151 + $0x48] sm:$0xff] %vm156, 0.0
          %167 = vst.msk [vmem:[%s151 + $0x50] sm:$0xff] %vm156, 0.0
          %168 = vst.msk [vmem:[%s151 + $0x58] sm:$0xff] %vm156, 0.0
          %169 = vst.msk [vmem:[%s151 + $0x60] sm:$0xff] %vm156, 0.0
          %170 = vst.msk [vmem:[%s151 + $0x68] sm:$0xff] %vm156, 0.0
          %171 = vst.msk [vmem:[%s151 + $0x70] sm:$0xff] %vm156, 0.0
          %172 = vst.msk [vmem:[%s151 + $0x78] sm:$0xff] %vm156, 0.0
          %173 = vst.msk [vmem:[%s151 + $0x80] sm:$0xff] %vm156, 0.0
          %174 = vst.msk [vmem:[%s151 + $0x88] sm:$0xff] %vm156, 0.0
          %175 = vst.msk [vmem:[%s151 + $0x90] sm:$0xff] %vm156, 0.0
          %176 = vst.msk [vmem:[%s151 + $0x98] sm:$0xff] %vm156, 0.0
          %177 = vst.msk [vmem:[%s151 + $0xa0] sm:$0xff] %vm156, 0.0
          %178 = vst.msk [vmem:[%s151 + $0xa8] sm:$0xff] %vm156, 0.0
          %179 = vst.msk [vmem:[%s151 + $0xb0] sm:$0xff] %vm156, 0.0
          %180 = vst.msk [vmem:[%s151 + $0xb8] sm:$0xff] %vm156, 0.0
          %181 = vst.msk [vmem:[%s151 + $0xc0] sm:$0xff] %vm156, 0.0
          %182 = vst.msk [vmem:[%s151 + $0xc8] sm:$0xff] %vm156, 0.0
          %183 = vst.msk [vmem:[%s151 + $0xd0] sm:$0xff] %vm156, 0.0
          %184 = vst.msk [vmem:[%s151 + $0xd8] sm:$0xff] %vm156, 0.0
          %185 = vst.msk [vmem:[%s151 + $0xe0] sm:$0xff] %vm156, 0.0
          %186 = vst.msk [vmem:[%s151 + $0xe8] sm:$0xff] %vm156, 0.0
          %187 = vst.msk [vmem:[%s151 + $0xf0] sm:$0xff] %vm156, 0.0
          %188 = vst.msk [vmem:[%s151 + $0xf8] sm:$0xff] %vm156, 0.0
        $region32: #{tpu_custom_call.1} parent=23 // pred_fallthru
          _
        %v189 = vld [vmem:[%s151] sm:$0xff]
        %v190 = vld [vmem:[%s151 + $0x8] sm:$0xff]
        %v191 = vld [vmem:[%s151 + $0x10] sm:$0xff]
        %v192 = vld [vmem:[%s151 + $0x18] sm:$0xff]
        %v193 = vld [vmem:[%s151 + $0x20] sm:$0xff]
        %v194 = vld [vmem:[%s151 + $0x28] sm:$0xff]
        %v195 = vld [vmem:[%s151 + $0x30] sm:$0xff]
        %v196 = vld [vmem:[%s151 + $0x38] sm:$0xff]
        %v197 = vld [vmem:[%s151 + $0x40] sm:$0xff]
        %v198 = vld [vmem:[%s151 + $0x48] sm:$0xff]
        %v199 = vld [vmem:[%s151 + $0x50] sm:$0xff]
        %v200 = vld [vmem:[%s151 + $0x58] sm:$0xff]
        %v201 = vld [vmem:[%s151 + $0x60] sm:$0xff]
        %v202 = vld [vmem:[%s151 + $0x68] sm:$0xff]
        %v203 = vld [vmem:[%s151 + $0x70] sm:$0xff]
        %v204 = vld [vmem:[%s151 + $0x78] sm:$0xff]
        %v205 = vld [vmem:[%s151 + $0x80] sm:$0xff]
        %v206 = vld [vmem:[%s151 + $0x88] sm:$0xff]
        %v207 = vld [vmem:[%s151 + $0x90] sm:$0xff]
        %v208 = vld [vmem:[%s151 + $0x98] sm:$0xff]
        %v209 = vld [vmem:[%s151 + $0xa0] sm:$0xff]
        %v210 = vld [vmem:[%s151 + $0xa8] sm:$0xff]
        %v211 = vld [vmem:[%s151 + $0xb0] sm:$0xff]
        %v212 = vld [vmem:[%s151 + $0xb8] sm:$0xff]
        %v213 = vld [vmem:[%s151 + $0xc0] sm:$0xff]
        %v214 = vld [vmem:[%s151 + $0xc8] sm:$0xff]
        %v215 = vld [vmem:[%s151 + $0xd0] sm:$0xff]
        %v216 = vld [vmem:[%s151 + $0xd8] sm:$0xff]
        %v217 = vld [vmem:[%s151 + $0xe0] sm:$0xff]
        %v218 = vld [vmem:[%s151 + $0xe8] sm:$0xff]
        %v219 = vld [vmem:[%s151 + $0xf0] sm:$0xff]
        %v220 = vld [vmem:[%s151 + $0xf8] sm:$0xff]
        %v221 = vld [vmem:[%s128] sm:$0xff]
        %v222 = vld [vmem:[%s128 + $0x8] sm:$0xff]
        %v223 = vld [vmem:[%s128 + $0x10] sm:$0xff]
        %v224 = vld [vmem:[%s128 + $0x18] sm:$0xff]
        %v225 = vld [vmem:[%s128 + $0x20] sm:$0xff]
        %v226 = vld [vmem:[%s128 + $0x28] sm:$0xff]
        %v227 = vld [vmem:[%s128 + $0x30] sm:$0xff]
        %v228 = vld [vmem:[%s128 + $0x38] sm:$0xff]
        %v229 = vld [vmem:[%s128 + $0x40] sm:$0xff]
        %v230 = vld [vmem:[%s128 + $0x48] sm:$0xff]
        %v231 = vld [vmem:[%s128 + $0x50] sm:$0xff]
        %v232 = vld [vmem:[%s128 + $0x58] sm:$0xff]
        %v233 = vld [vmem:[%s128 + $0x60] sm:$0xff]
        %v234 = vld [vmem:[%s128 + $0x68] sm:$0xff]
        %v235 = vld [vmem:[%s128 + $0x70] sm:$0xff]
        %v236 = vld [vmem:[%s128 + $0x78] sm:$0xff]
        %v237 = vld [vmem:[%s128 + $0x80] sm:$0xff]
        %v238 = vld [vmem:[%s128 + $0x88] sm:$0xff]
        %v239 = vld [vmem:[%s128 + $0x90] sm:$0xff]
        %v240 = vld [vmem:[%s128 + $0x98] sm:$0xff]
        %v241 = vld [vmem:[%s128 + $0xa0] sm:$0xff]
        %v242 = vld [vmem:[%s128 + $0xa8] sm:$0xff]
        %v243 = vld [vmem:[%s128 + $0xb0] sm:$0xff]
        %v244 = vld [vmem:[%s128 + $0xb8] sm:$0xff]
        %v245 = vld [vmem:[%s128 + $0xc0] sm:$0xff]
        %v246 = vld [vmem:[%s128 + $0xc8] sm:$0xff]
        %v247 = vld [vmem:[%s128 + $0xd0] sm:$0xff]
        %v248 = vld [vmem:[%s128 + $0xd8] sm:$0xff]
        %v249 = vld [vmem:[%s128 + $0xe0] sm:$0xff]
        %v250 = vld [vmem:[%s128 + $0xe8] sm:$0xff]
        %v251 = vld [vmem:[%s128 + $0xf0] sm:$0xff]
        %v252 = vld [vmem:[%s128 + $0xf8] sm:$0xff]
        %253 = vadd.xlane.f32.xlu0 %v221
        %v254 = vpop.xlane.xlu0 %253
        %255 = vadd.xlane.f32.xlu0 %v222
        %v256 = vpop.xlane.xlu0 %255
        %257 = vadd.xlane.f32.xlu0 %v223
        %v258 = vpop.xlane.xlu0 %257
        %259 = vadd.xlane.f32.xlu0 %v224
        %v260 = vpop.xlane.xlu0 %259
        %261 = vadd.xlane.f32.xlu0 %v225
        %v262 = vpop.xlane.xlu0 %261
        %263 = vadd.xlane.f32.xlu0 %v226
        %v264 = vpop.xlane.xlu0 %263
        %265 = vadd.xlane.f32.xlu0 %v227
        %v266 = vpop.xlane.xlu0 %265
        %267 = vadd.xlane.f32.xlu0 %v228
        %v268 = vpop.xlane.xlu0 %267
        %269 = vadd.xlane.f32.xlu0 %v229
        %v270 = vpop.xlane.xlu0 %269
        %271 = vadd.xlane.f32.xlu0 %v230
        %v272 = vpop.xlane.xlu0 %271
        %273 = vadd.xlane.f32.xlu0 %v231
        %v274 = vpop.xlane.xlu0 %273
        %275 = vadd.xlane.f32.xlu0 %v232
        %v276 = vpop.xlane.xlu0 %275
        %277 = vadd.xlane.f32.xlu0 %v233
        %v278 = vpop.xlane.xlu0 %277
        %279 = vadd.xlane.f32.xlu0 %v234
        %v280 = vpop.xlane.xlu0 %279
        %281 = vadd.xlane.f32.xlu0 %v235
        %v282 = vpop.xlane.xlu0 %281
        %283 = vadd.xlane.f32.xlu0 %v236
        %v284 = vpop.xlane.xlu0 %283
        %285 = vadd.xlane.f32.xlu0 %v237
        %v286 = vpop.xlane.xlu0 %285
        %287 = vadd.xlane.f32.xlu0 %v238
        %v288 = vpop.xlane.xlu0 %287
        %289 = vadd.xlane.f32.xlu0 %v239
        %v290 = vpop.xlane.xlu0 %289
        %291 = vadd.xlane.f32.xlu0 %v240
        %v292 = vpop.xlane.xlu0 %291
        %293 = vadd.xlane.f32.xlu0 %v241
        %v294 = vpop.xlane.xlu0 %293
        %295 = vadd.xlane.f32.xlu0 %v242
        %v296 = vpop.xlane.xlu0 %295
        %297 = vadd.xlane.f32.xlu0 %v243
        %v298 = vpop.xlane.xlu0 %297
        %299 = vadd.xlane.f32.xlu0 %v244
        %v300 = vpop.xlane.xlu0 %299
        %301 = vadd.xlane.f32.xlu0 %v245
        %v302 = vpop.xlane.xlu0 %301
        %303 = vadd.xlane.f32.xlu0 %v246
        %v304 = vpop.xlane.xlu0 %303
        %305 = vadd.xlane.f32.xlu0 %v247
        %v306 = vpop.xlane.xlu0 %305
        %307 = vadd.xlane.f32.xlu0 %v248
        %v308 = vpop.xlane.xlu0 %307
        %309 = vadd.xlane.f32.xlu0 %v249
        %v310 = vpop.xlane.xlu0 %309
        %311 = vadd.xlane.f32.xlu0 %v250
        %v312 = vpop.xlane.xlu0 %311
        %313 = vadd.xlane.f32.xlu0 %v251
        %v314 = vpop.xlane.xlu0 %313
        %315 = vadd.xlane.f32.xlu0 %v252
        %v316 = vpop.xlane.xlu0 %315
        %v317 = vadd.f32 %v189, %v254
        %v318 = vadd.f32 %v190, %v256
        %v319 = vadd.f32 %v191, %v258
        %v320 = vadd.f32 %v192, %v260
        %v321 = vadd.f32 %v193, %v262
        %v322 = vadd.f32 %v194, %v264
        %v323 = vadd.f32 %v195, %v266
        %v324 = vadd.f32 %v196, %v268
        %v325 = vadd.f32 %v197, %v270
        %v326 = vadd.f32 %v198, %v272
        %v327 = vadd.f32 %v199, %v274
        %v328 = vadd.f32 %v200, %v276
        %v329 = vadd.f32 %v201, %v278
        %v330 = vadd.f32 %v202, %v280
        %v331 = vadd.f32 %v203, %v282
        %v332 = vadd.f32 %v204, %v284
        %v333 = vadd.f32 %v205, %v286
        %v334 = vadd.f32 %v206, %v288
        %v335 = vadd.f32 %v207, %v290
        %v336 = vadd.f32 %v208, %v292
        %v337 = vadd.f32 %v209, %v294
        %v338 = vadd.f32 %v210, %v296
        %v339 = vadd.f32 %v211, %v298
        %v340 = vadd.f32 %v212, %v300
        %v341 = vadd.f32 %v213, %v302
        %v342 = vadd.f32 %v214, %v304
        %v343 = vadd.f32 %v215, %v306
        %v344 = vadd.f32 %v216, %v308
        %v345 = vadd.f32 %v217, %v310
        %v346 = vadd.f32 %v218, %v312
        %v347 = vadd.f32 %v219, %v314
        %v348 = vadd.f32 %v220, %v316
        %vm349 = vcmask 7168
        %350 = vst.msk [vmem:[%s151] sm:$0xff] %vm349, %v317
        %351 = vst.msk [vmem:[%s151 + $0x8] sm:$0xff] %vm349, %v318
        %352 = vst.msk [vmem:[%s151 + $0x10] sm:$0xff] %vm349, %v319
        %353 = vst.msk [vmem:[%s151 + $0x18] sm:$0xff] %vm349, %v320
        %354 = vst.msk [vmem:[%s151 + $0x20] sm:$0xff] %vm349, %v321
        %355 = vst.msk [vmem:[%s151 + $0x28] sm:$0xff] %vm349, %v322
        %356 = vst.msk [vmem:[%s151 + $0x30] sm:$0xff] %vm349, %v323
        %357 = vst.msk [vmem:[%s151 + $0x38] sm:$0xff] %vm349, %v324
        %358 = vst.msk [vmem:[%s151 + $0x40] sm:$0xff] %vm349, %v325
        %359 = vst.msk [vmem:[%s151 + $0x48] sm:$0xff] %vm349, %v326
        %360 = vst.msk [vmem:[%s151 + $0x50] sm:$0xff] %vm349, %v327
        %361 = vst.msk [vmem:[%s151 + $0x58] sm:$0xff] %vm349, %v328
        %362 = vst.msk [vmem:[%s151 + $0x60] sm:$0xff] %vm349, %v329
        %363 = vst.msk [vmem:[%s151 + $0x68] sm:$0xff] %vm349, %v330
        %364 = vst.msk [vmem:[%s151 + $0x70] sm:$0xff] %vm349, %v331
        %365 = vst.msk [vmem:[%s151 + $0x78] sm:$0xff] %vm349, %v332
        %366 = vst.msk [vmem:[%s151 + $0x80] sm:$0xff] %vm349, %v333
        %367 = vst.msk [vmem:[%s151 + $0x88] sm:$0xff] %vm349, %v334
        %368 = vst.msk [vmem:[%s151 + $0x90] sm:$0xff] %vm349, %v335
        %369 = vst.msk [vmem:[%s151 + $0x98] sm:$0xff] %vm349, %v336
        %370 = vst.msk [vmem:[%s151 + $0xa0] sm:$0xff] %vm349, %v337
        %371 = vst.msk [vmem:[%s151 + $0xa8] sm:$0xff] %vm349, %v338
        %372 = vst.msk [vmem:[%s151 + $0xb0] sm:$0xff] %vm349, %v339
        %373 = vst.msk [vmem:[%s151 + $0xb8] sm:$0xff] %vm349, %v340
        %374 = vst.msk [vmem:[%s151 + $0xc0] sm:$0xff] %vm349, %v341
        %375 = vst.msk [vmem:[%s151 + $0xc8] sm:$0xff] %vm349, %v342
        %376 = vst.msk [vmem:[%s151 + $0xd0] sm:$0xff] %vm349, %v343
        %377 = vst.msk [vmem:[%s151 + $0xd8] sm:$0xff] %vm349, %v344
        %378 = vst.msk [vmem:[%s151 + $0xe0] sm:$0xff] %vm349, %v345
        %379 = vst.msk [vmem:[%s151 + $0xe8] sm:$0xff] %vm349, %v346
        %380 = vst.msk [vmem:[%s151 + $0xf0] sm:$0xff] %vm349, %v347
        %381 = vst.msk [vmem:[%s151 + $0xf8] sm:$0xff] %vm349, %v348
        %p382 = scmp.eq.s32.totalorder %s20, 1
        // Predicated region
        $region33: #{tpu_custom_call.1} parent=23 // pred_check
          %p383 = pneg %p382
        $region34: #{tpu_custom_call.1} parent=23 // pred_check_branch
          %385 = sbr.rel (%p383) target = $region36
        $region35: #{tpu_custom_call.1} parent=23 // pred_region
          %v386 = vld [vmem:[%s151] sm:$0xff]
          %v387 = vld [vmem:[%s151 + $0x8] sm:$0xff]
          %v388 = vld [vmem:[%s151 + $0x10] sm:$0xff]
          %v389 = vld [vmem:[%s151 + $0x18] sm:$0xff]
          %v390 = vld [vmem:[%s151 + $0x20] sm:$0xff]
          %v391 = vld [vmem:[%s151 + $0x28] sm:$0xff]
          %v392 = vld [vmem:[%s151 + $0x30] sm:$0xff]
          %v393 = vld [vmem:[%s151 + $0x38] sm:$0xff]
          %v394 = vld [vmem:[%s151 + $0x40] sm:$0xff]
          %v395 = vld [vmem:[%s151 + $0x48] sm:$0xff]
          %v396 = vld [vmem:[%s151 + $0x50] sm:$0xff]
          %v397 = vld [vmem:[%s151 + $0x58] sm:$0xff]
          %v398 = vld [vmem:[%s151 + $0x60] sm:$0xff]
          %v399 = vld [vmem:[%s151 + $0x68] sm:$0xff]
          %v400 = vld [vmem:[%s151 + $0x70] sm:$0xff]
          %v401 = vld [vmem:[%s151 + $0x78] sm:$0xff]
          %v402 = vld [vmem:[%s151 + $0x80] sm:$0xff]
          %v403 = vld [vmem:[%s151 + $0x88] sm:$0xff]
          %v404 = vld [vmem:[%s151 + $0x90] sm:$0xff]
          %v405 = vld [vmem:[%s151 + $0x98] sm:$0xff]
          %v406 = vld [vmem:[%s151 + $0xa0] sm:$0xff]
          %v407 = vld [vmem:[%s151 + $0xa8] sm:$0xff]
          %v408 = vld [vmem:[%s151 + $0xb0] sm:$0xff]
          %v409 = vld [vmem:[%s151 + $0xb8] sm:$0xff]
          %v410 = vld [vmem:[%s151 + $0xc0] sm:$0xff]
          %v411 = vld [vmem:[%s151 + $0xc8] sm:$0xff]
          %v412 = vld [vmem:[%s151 + $0xd0] sm:$0xff]
          %v413 = vld [vmem:[%s151 + $0xd8] sm:$0xff]
          %v414 = vld [vmem:[%s151 + $0xe0] sm:$0xff]
          %v415 = vld [vmem:[%s151 + $0xe8] sm:$0xff]
          %v416 = vld [vmem:[%s151 + $0xf0] sm:$0xff]
          %v417 = vld [vmem:[%s151 + $0xf8] sm:$0xff]
          %v418 = vmul.f32 %v386, 0.00390625
          %v419 = vmul.f32 %v387, 0.00390625
          %v420 = vmul.f32 %v388, 0.00390625
          %v421 = vmul.f32 %v389, 0.00390625
          %v422 = vmul.f32 %v390, 0.00390625
          %v423 = vmul.f32 %v391, 0.00390625
          %v424 = vmul.f32 %v392, 0.00390625
          %v425 = vmul.f32 %v393, 0.00390625
          %v426 = vmul.f32 %v394, 0.00390625
          %v427 = vmul.f32 %v395, 0.00390625
          %v428 = vmul.f32 %v396, 0.00390625
          %v429 = vmul.f32 %v397, 0.00390625
          %v430 = vmul.f32 %v398, 0.00390625
          %v431 = vmul.f32 %v399, 0.00390625
          %v432 = vmul.f32 %v400, 0.00390625
          %v433 = vmul.f32 %v401, 0.00390625
          %v434 = vmul.f32 %v402, 0.00390625
          %v435 = vmul.f32 %v403, 0.00390625
          %v436 = vmul.f32 %v404, 0.00390625
          %v437 = vmul.f32 %v405, 0.00390625
          %v438 = vmul.f32 %v406, 0.00390625
          %v439 = vmul.f32 %v407, 0.00390625
          %v440 = vmul.f32 %v408, 0.00390625
          %v441 = vmul.f32 %v409, 0.00390625
          %v442 = vmul.f32 %v410, 0.00390625
          %v443 = vmul.f32 %v411, 0.00390625
          %v444 = vmul.f32 %v412, 0.00390625
          %v445 = vmul.f32 %v413, 0.00390625
          %v446 = vmul.f32 %v414, 0.00390625
          %v447 = vmul.f32 %v415, 0.00390625
          %v448 = vmul.f32 %v416, 0.00390625
          %v449 = vmul.f32 %v417, 0.00390625
          %450 = vst.msk [vmem:[%s151] sm:$0xff] %vm349, %v418
          %451 = vst.msk [vmem:[%s151 + $0x8] sm:$0xff] %vm349, %v419
          %452 = vst.msk [vmem:[%s151 + $0x10] sm:$0xff] %vm349, %v420
          %453 = vst.msk [vmem:[%s151 + $0x18] sm:$0xff] %vm349, %v421
          %454 = vst.msk [vmem:[%s151 + $0x20] sm:$0xff] %vm349, %v422
          %455 = vst.msk [vmem:[%s151 + $0x28] sm:$0xff] %vm349, %v423
          %456 = vst.msk [vmem:[%s151 + $0x30] sm:$0xff] %vm349, %v424
          %457 = vst.msk [vmem:[%s151 + $0x38] sm:$0xff] %vm349, %v425
          %458 = vst.msk [vmem:[%s151 + $0x40] sm:$0xff] %vm349, %v426
          %459 = vst.msk [vmem:[%s151 + $0x48] sm:$0xff] %vm349, %v427
          %460 = vst.msk [vmem:[%s151 + $0x50] sm:$0xff] %vm349, %v428
          %461 = vst.msk [vmem:[%s151 + $0x58] sm:$0xff] %vm349, %v429
          %462 = vst.msk [vmem:[%s151 + $0x60] sm:$0xff] %vm349, %v430
          %463 = vst.msk [vmem:[%s151 + $0x68] sm:$0xff] %vm349, %v431
          %464 = vst.msk [vmem:[%s151 + $0x70] sm:$0xff] %vm349, %v432
          %465 = vst.msk [vmem:[%s151 + $0x78] sm:$0xff] %vm349, %v433
          %466 = vst.msk [vmem:[%s151 + $0x80] sm:$0xff] %vm349, %v434
          %467 = vst.msk [vmem:[%s151 + $0x88] sm:$0xff] %vm349, %v435
          %468 = vst.msk [vmem:[%s151 + $0x90] sm:$0xff] %vm349, %v436
          %469 = vst.msk [vmem:[%s151 + $0x98] sm:$0xff] %vm349, %v437
          %470 = vst.msk [vmem:[%s151 + $0xa0] sm:$0xff] %vm349, %v438
          %471 = vst.msk [vmem:[%s151 + $0xa8] sm:$0xff] %vm349, %v439
          %472 = vst.msk [vmem:[%s151 + $0xb0] sm:$0xff] %vm349, %v440
          %473 = vst.msk [vmem:[%s151 + $0xb8] sm:$0xff] %vm349, %v441
          %474 = vst.msk [vmem:[%s151 + $0xc0] sm:$0xff] %vm349, %v442
          %475 = vst.msk [vmem:[%s151 + $0xc8] sm:$0xff] %vm349, %v443
          %476 = vst.msk [vmem:[%s151 + $0xd0] sm:$0xff] %vm349, %v444
          %477 = vst.msk [vmem:[%s151 + $0xd8] sm:$0xff] %vm349, %v445
          %478 = vst.msk [vmem:[%s151 + $0xe0] sm:$0xff] %vm349, %v446
          %479 = vst.msk [vmem:[%s151 + $0xe8] sm:$0xff] %vm349, %v447
          %480 = vst.msk [vmem:[%s151 + $0xf0] sm:$0xff] %vm349, %v448
          %481 = vst.msk [vmem:[%s151 + $0xf8] sm:$0xff] %vm349, %v449
        $region36: #{tpu_custom_call.1} parent=23 // pred_fallthru
          _
        %p482 = scmp.lt.s32.totalorder %s19, 1
        %s483 = scalar_select %p482, %s19, 1
        %s484 = smul.addr %s483, 32
        %s485 = smul.addr %s484, 8
        %s486 = scalar_lea.vmem %s1, %s485
        // Predicated region
        $region37: #{tpu_custom_call.1} parent=23 // pred_check
          %p487 = pneg %p73
        $region38: #{tpu_custom_call.1} parent=23 // pred_check_branch
          %489 = sbr.rel (%p487) target = $region40
        $region39: #{tpu_custom_call.1} parent=23 // pred_region
          _
        $region40: #{tpu_custom_call.1} parent=23 // pred_fallthru
          _
      $region24: #{tpu_custom_call.1} parent=5 // pred_fallthru
        _
      %p490 = scmp.le.s32.totalorder 2, %s10
      // Predicated region
      $region41: #{tpu_custom_call.1} parent=5 // pred_check
        %p491 = pneg %p490
      $region42: #{tpu_custom_call.1} parent=5 // pred_check_branch
        %493 = sbr.rel (%p491) target = $region44
      $region43: #{tpu_custom_call.1} parent=5 // pred_region
        %s494 = ssub.s32 %s10, 2
        // Predicated region
        $region45: #{tpu_custom_call.1} parent=43 // pred_check
          %p495 = pneg %p79
        $region46: #{tpu_custom_call.1} parent=43 // pred_check_branch
          %497 = sbr.rel (%p495) target = $region48
        $region47: #{tpu_custom_call.1} parent=43 // pred_region
          %p498 = scmp.lt.s32.totalorder %s21, 1
          %s499 = scalar_select %p498, %s21, 1
          %s500 = smul.addr %s499, 32
          %s501 = smul.addr %s500, 8
          %s502 = scalar_lea.vmem %s1, %s501
        $region48: #{tpu_custom_call.1} parent=43 // pred_fallthru
          _
      $region44: #{tpu_custom_call.1} parent=5 // pred_fallthru
        _
    $region6: #{tpu_custom_call.1} parent=1 // loop_footer
      %s14 = sadd.s32 1, %s10
    $region7: #{tpu_custom_call.1} parent=1 // loop_footer_branch
      %9 = sbr.rel target = $region3
    $region8: #{tpu_custom_call.1} parent=1 // loop_exit
      _
    %503 = vsyncpa [#allocation3], 1
    %s504 = scalar_lea.sflag [#allocation3], 1
    %505 = vsyncpa %s504, 1

</llo_original>
